<compile_context>
chip_gen: v7x
topology: tpu7x:2x2x1
jax: 0.10.0
libtpu: 0.0.40
codegen_flags: <defaults>
</compile_context>

<pallas_src>
import functools

import jax
import jax.numpy as jnp
from jax.experimental import pallas as pl
from jax.experimental.pallas import tpu as pltpu

LEVEL_IDS = (128, 256, 512, 640, 768)
LEVEL_WEIGHTS = (5.0, 4.0, 3.0, 2.0, 1.0)
OUT_DIM = 1024
_NEG_BIG = -1e30  # effectively -inf for the masked (closeset) softmax


def _choose_tk(D):
    """K-tile size: full D unless D is a multiple of 128 (then tile <= 512)."""
    if D % 128 != 0:
        return D
    for tk in (512, 256, 128):
        if D % tk == 0:
            return min(tk, D)
    return D


def _lm_head_score_kernel(x_ref, w_ref, b_ref, scores_ref, acc_ref, *, closeset):
    """Fused lm_head matmul (K-tiled) + get_score for one A/B slab.

    x_ref:      (Bp, tk)       activation K-slice for this grid step
    w_ref:      (tk, 1024)     lm_head weight K-slice (already (D, 1024) layout)
    b_ref:      (1, 1024)      lm_head bias
    scores_ref: (Bp, 128)      output scores (broadcast along lanes; col 0 used)
    acc_ref:    (Bp, 1024) f32 VMEM accumulator (logits)
    """
    k = pl.program_id(1)
    nk = pl.num_programs(1)

    # Init accumulator with the bias on the first K step.
    @pl.when(k == 0)
    def _():
        acc_ref[...] = jnp.broadcast_to(b_ref[...], acc_ref.shape)

    # Accumulate this K-slice on the MXU.
    acc_ref[...] += jnp.dot(x_ref[...], w_ref[...],
                            preferred_element_type=jnp.float32)

    # Finalize: softmax statistics + level-weighted score on the last K step.
    @pl.when(k == nk - 1)
    def _():
        logits = acc_ref[...]                                        # (Bp, 1024)

        # Static lane masks for the level columns (no gather, no 2nd matmul).
        col = jax.lax.broadcasted_iota(jnp.int32, (1, OUT_DIM), 1)   # (1, 1024)
        is_lvl = (col == LEVEL_IDS[0])
        wmap = jnp.where(col == LEVEL_IDS[0],
                         jnp.float32(LEVEL_WEIGHTS[0]), jnp.float32(0.0))
        for lid, wt in zip(LEVEL_IDS[1:], LEVEL_WEIGHTS[1:]):
            is_lvl = is_lvl | (col == lid)
            wmap = wmap + jnp.where(col == lid, jnp.float32(wt), jnp.float32(0.0))

        if closeset:
            # softmax restricted to the 5 level logits (masked columns -> 0).
            sel = jnp.where(is_lvl, logits, _NEG_BIG)
        else:
            # full 1024-way softmax; wmap zeroes non-level columns in the
            # numerator, denominator is the full sum -> probs_org[:, ids] @ w.
            sel = logits

        m = jnp.max(sel, axis=1, keepdims=True)                      # (Bp, 1)
        ex = jnp.exp(sel - m)                                        # (Bp, 1024)
        denom = jnp.sum(ex, axis=1, keepdims=True)                   # (Bp, 1)
        num = jnp.sum(ex * wmap, axis=1, keepdims=True)              # (Bp, 1)
        scores = num * pl.reciprocal(denom, approx=True)             # (Bp, 1)

        # Lane-dense store (avoid a masked vst on a width-1 output).
        scores_ref[...] = jnp.broadcast_to(scores, scores_ref.shape)


def lm_head_scores(x, W, b2d, closeset):
    """x: (2*Bp, D) stacked [A; B] activations. Returns scores (2*Bp,) f32."""
    R, D = x.shape
    Bp = R // 2
    tk = _choose_tk(D)
    nk = D // tk

    kernel = functools.partial(_lm_head_score_kernel, closeset=closeset)
    out = pl.pallas_call(
        kernel,
        out_shape=jax.ShapeDtypeStruct((R, 128), jnp.float32),
        grid_spec=pltpu.PrefetchScalarGridSpec(
            num_scalar_prefetch=0,
            grid=(2, nk),                                       # (A/B slab, K)
            in_specs=[
                pl.BlockSpec((Bp, tk), lambda i, k: (i, k)),         # x
                pl.BlockSpec((tk, OUT_DIM), lambda i, k: (k, 0)),    # W
                pl.BlockSpec((1, OUT_DIM), lambda i, k: (0, 0)),     # bias
            ],
            out_specs=pl.BlockSpec((Bp, 128), lambda i, k: (i, 0)),
            scratch_shapes=[pltpu.VMEM((Bp, OUT_DIM), jnp.float32)],
        ),
        compiler_params=pltpu.CompilerParams(
            dimension_semantics=("parallel", "arbitrary")),
    )(x, W, b2d)
    return out[:, 0]


def my_model_forward(params, x_A, x_B, gt, *, closeset=True):
    """JAX equivalent of MyModel.forward (returns the scalar rating loss)."""
    W = params["weight"]            # (D, 1024) — transposed vs torch's (1024, D)
    b = params["bias"]              # (1024,)
    B, D = x_A.shape

    # Pad the batch to a sublane multiple so block shapes are (8k, *).
    Bp = ((B + 7) // 8) * 8

    def _pad(x):
        return x if Bp == B else jnp.pad(x, ((0, Bp - B), (0, 0)))

    x = jnp.concatenate([_pad(x_A), _pad(x_B)], axis=0)       # (2*Bp, D)
    scores = lm_head_scores(x, W, b.reshape(1, OUT_DIM), closeset)
    scores_A = scores[:B]
    scores_B = scores[Bp:Bp + B]

    # rating_loss: tiny elementwise op over B scalars -> plain JAX glue.
    # TODO(synk): erf stays outside the Pallas kernel (no guaranteed Mosaic
    # lowering for the erf primitive); it operates on only B elements.
    pred = 0.5 * (1.0 + jax.scipy.special.erf((scores_A - scores_B) / 2.0))
    eps = 1e-08
    loss = jnp.mean(1.0 - jnp.sqrt(pred * gt + eps)
                    - jnp.sqrt((1.0 - pred) * (1.0 - gt) + eps))
    return loss


def _reference_forward(params, x_A, x_B, gt, *, closeset=True):
    """Pure-JAX reference (mirrors the PyTorch module) for a sanity check."""
    W, b = params["weight"], params["bias"]
    ids = jnp.asarray(LEVEL_IDS)
    wts = jnp.asarray(LEVEL_WEIGHTS, dtype=jnp.float32)

    def get_score(logits):
        probs_org = jax.nn.softmax(logits, axis=1)
        if closeset:
            probs = jax.nn.softmax(logits[:, ids], axis=1)
        else:
            probs = probs_org[:, ids]
        return probs @ wts

    sA = get_score(x_A @ W + b)
    sB = get_score(x_B @ W + b)
    pred = 0.5 * (1.0 + jax.scipy.special.erf((sA - sB) / 2.0))
    eps = 1e-08
    return jnp.mean(1.0 - jnp.sqrt(pred * gt + eps)
                    - jnp.sqrt((1.0 - pred) * (1.0 - gt) + eps))


if __name__ == "__main__":
    B, D = 8, 32                      # batch=8, dim_in=32 (small test shapes)

    key = jax.random.PRNGKey(0)
    k1, k2, k3, k4, k5 = jax.random.split(key, 5)

    # Deterministic lm_head init (same scheme as torch.nn.Linear default).
    bound = 1.0 / (D ** 0.5)
    W = jax.random.uniform(k1, (D, OUT_DIM), jnp.float32, -bound, bound)
    b = jax.random.uniform(k2, (OUT_DIM,), jnp.float32, -bound, bound)
    params = {"weight": W, "bias": b}

    x_A = jax.random.normal(k3, (B, D), dtype=jnp.float32)
    x_B = jax.random.normal(k4, (B, D), dtype=jnp.float32)
    gt = jax.random.uniform(k5, (B,), dtype=jnp.float32)    # labels in [0, 1]

    loss = my_model_forward(params, x_A, x_B, gt, closeset=True)
    jax.block_until_ready(loss)

    # Light correctness check against the pure-JAX reference (generous tol to
    # absorb the approximate EUP reciprocal in the softmax denominator).
    ref = _reference_forward(params, x_A, x_B, gt, closeset=True)
    assert jnp.allclose(loss, ref, atol=1e-2, rtol=1e-2), (loss, ref)

    print("KERNEL_OK")
</pallas_src>

<mosaic_0001>
module attributes {stable_mosaic.version = 11 : i64} {
  func.func @_lm_head_score_kernel(%arg0: i32, %arg1: i32, %arg2: memref<8x32xf32, #tpu.memory_space<vmem>>, %arg3: memref<32x1024xf32, #tpu.memory_space<vmem>>, %arg4: memref<1x1024xf32, #tpu.memory_space<vmem>>, %arg5: memref<8x128xf32, #tpu.memory_space<vmem>>, %arg6: memref<8x1024xf32, #tpu.memory_space<vmem>>) attributes {dimension_semantics = [#tpu.dimension_semantics<parallel>, #tpu.dimension_semantics<arbitrary>], iteration_bounds = array<i64: 2, 1>, scalar_prefetch = 0 : i64, scratch_operands = 1 : i64, tpu.core_type = #tpu.core_type<tc>, window_params = [{transform_indices = @transform_0, window_bounds = array<i64: 8, 32>}, {transform_indices = @transform_1, window_bounds = array<i64: 32, 1024>}, {pipeline_mode = #tpu.pipeline_mode<synchronous>, transform_indices = @transform_2, window_bounds = array<i64: 1, 1024>}, {transform_indices = @transform_3, window_bounds = array<i64: 8, 128>}]} {
    %c0_i32 = arith.constant 0 : i32
    %0 = arith.cmpi eq, %arg1, %c0_i32 : i32
    %1 = arith.extui %0 : i1 to i32
    %c0_i32_0 = arith.constant 0 : i32
    %2 = arith.cmpi ne, %1, %c0_i32_0 : i32
    scf.if %2 {
      %c0_10 = arith.constant 0 : index
      %c0_11 = arith.constant 0 : index
      %12 = vector.load %arg4[%c0_10, %c0_11] : memref<1x1024xf32, #tpu.memory_space<vmem>>, vector<1x1024xf32>
      %13 = vector.shape_cast %12 : vector<1x1024xf32> to vector<1x1024xf32>
      %14 = vector.broadcast %13 : vector<1x1024xf32> to vector<8x1024xf32>
      %c0_12 = arith.constant 0 : index
      %c0_13 = arith.constant 0 : index
      %15 = vector.load %arg6[%c0_12, %c0_13] : memref<8x1024xf32, #tpu.memory_space<vmem>>, vector<8x1024xf32>
      tpu.vector_store %arg6[%c0_12, %c0_13], %14 {strides = array<i32>} : memref<8x1024xf32, #tpu.memory_space<vmem>>, vector<8x1024xf32>,
    } else {
    }
    %c0 = arith.constant 0 : index
    %c0_1 = arith.constant 0 : index
    %3 = vector.load %arg6[%c0, %c0_1] : memref<8x1024xf32, #tpu.memory_space<vmem>>, vector<8x1024xf32>
    %c0_2 = arith.constant 0 : index
    %c0_3 = arith.constant 0 : index
    %4 = vector.load %arg2[%c0_2, %c0_3] : memref<8x32xf32, #tpu.memory_space<vmem>>, vector<8x32xf32>
    %c0_4 = arith.constant 0 : index
    %c0_5 = arith.constant 0 : index
    %5 = vector.load %arg3[%c0_4, %c0_5] : memref<32x1024xf32, #tpu.memory_space<vmem>>, vector<32x1024xf32>
    %cst = arith.constant dense<0.000000e+00> : vector<8x1024xf32>
    %6 = tpu.matmul %4, %5, %cst {dimension_numbers = #tpu.dot_dimension_numbers<[1], [0], [0], [1], [0, 0, 1, 1], [], []>} : vector<8x32xf32>, vector<32x1024xf32>, vector<8x1024xf32> -> vector<8x1024xf32>
    %7 = arith.addf %3, %6 : vector<8x1024xf32>
    %c0_6 = arith.constant 0 : index
    %c0_7 = arith.constant 0 : index
    %8 = vector.load %arg6[%c0_6, %c0_7] : memref<8x1024xf32, #tpu.memory_space<vmem>>, vector<8x1024xf32>
    tpu.vector_store %arg6[%c0_6, %c0_7], %7 {strides = array<i32>} : memref<8x1024xf32, #tpu.memory_space<vmem>>, vector<8x1024xf32>,
    %c0_i32_8 = arith.constant 0 : i32
    %9 = arith.cmpi eq, %arg1, %c0_i32_8 : i32
    %10 = arith.extui %9 : i1 to i32
    %c0_i32_9 = arith.constant 0 : i32
    %11 = arith.cmpi ne, %10, %c0_i32_9 : i32
    scf.if %11 {
      %c0_10 = arith.constant 0 : index
      %c0_11 = arith.constant 0 : index
      %12 = vector.load %arg6[%c0_10, %c0_11] : memref<8x1024xf32, #tpu.memory_space<vmem>>, vector<8x1024xf32>
      %13 = tpu.iota {dimensions = array<i32: 1>} : vector<1x1024xi32>
      %c128_i32 = arith.constant 128 : i32
      %14 = vector.broadcast %c128_i32 : i32 to vector<1x1024xi32>
      %15 = arith.cmpi eq, %13, %14 : vector<1x1024xi32>
      %c128_i32_12 = arith.constant 128 : i32
      %16 = vector.broadcast %c128_i32_12 : i32 to vector<1x1024xi32>
      %17 = arith.cmpi eq, %13, %16 : vector<1x1024xi32>
      %cst_13 = arith.constant 5.000000e+00 : f32
      %cst_14 = arith.constant 0.000000e+00 : f32
      %18 = vector.broadcast %cst_13 : f32 to vector<1x1024xf32>
      %19 = vector.broadcast %cst_14 : f32 to vector<1x1024xf32>
      %20 = arith.select %17, %18, %19 : vector<1x1024xi1>, vector<1x1024xf32>
      %c256_i32 = arith.constant 256 : i32
      %21 = vector.broadcast %c256_i32 : i32 to vector<1x1024xi32>
      %22 = arith.cmpi eq, %13, %21 : vector<1x1024xi32>
      %23 = arith.ori %15, %22 : vector<1x1024xi1>
      %c256_i32_15 = arith.constant 256 : i32
      %24 = vector.broadcast %c256_i32_15 : i32 to vector<1x1024xi32>
      %25 = arith.cmpi eq, %13, %24 : vector<1x1024xi32>
      %cst_16 = arith.constant 4.000000e+00 : f32
      %cst_17 = arith.constant 0.000000e+00 : f32
      %26 = vector.broadcast %cst_16 : f32 to vector<1x1024xf32>
      %27 = vector.broadcast %cst_17 : f32 to vector<1x1024xf32>
      %28 = arith.select %25, %26, %27 : vector<1x1024xi1>, vector<1x1024xf32>
      %29 = arith.addf %20, %28 : vector<1x1024xf32>
      %c512_i32 = arith.constant 512 : i32
      %30 = vector.broadcast %c512_i32 : i32 to vector<1x1024xi32>
      %31 = arith.cmpi eq, %13, %30 : vector<1x1024xi32>
      %32 = arith.ori %23, %31 : vector<1x1024xi1>
      %c512_i32_18 = arith.constant 512 : i32
      %33 = vector.broadcast %c512_i32_18 : i32 to vector<1x1024xi32>
      %34 = arith.cmpi eq, %13, %33 : vector<1x1024xi32>
      %cst_19 = arith.constant 3.000000e+00 : f32
      %cst_20 = arith.constant 0.000000e+00 : f32
      %35 = vector.broadcast %cst_19 : f32 to vector<1x1024xf32>
      %36 = vector.broadcast %cst_20 : f32 to vector<1x1024xf32>
      %37 = arith.select %34, %35, %36 : vector<1x1024xi1>, vector<1x1024xf32>
      %38 = arith.addf %29, %37 : vector<1x1024xf32>
      %c640_i32 = arith.constant 640 : i32
      %39 = vector.broadcast %c640_i32 : i32 to vector<1x1024xi32>
      %40 = arith.cmpi eq, %13, %39 : vector<1x1024xi32>
      %41 = arith.ori %32, %40 : vector<1x1024xi1>
      %c640_i32_21 = arith.constant 640 : i32
      %42 = vector.broadcast %c640_i32_21 : i32 to vector<1x1024xi32>
      %43 = arith.cmpi eq, %13, %42 : vector<1x1024xi32>
      %cst_22 = arith.constant 2.000000e+00 : f32
      %cst_23 = arith.constant 0.000000e+00 : f32
      %44 = vector.broadcast %cst_22 : f32 to vector<1x1024xf32>
      %45 = vector.broadcast %cst_23 : f32 to vector<1x1024xf32>
      %46 = arith.select %43, %44, %45 : vector<1x1024xi1>, vector<1x1024xf32>
      %47 = arith.addf %38, %46 : vector<1x1024xf32>
      %c768_i32 = arith.constant 768 : i32
      %48 = vector.broadcast %c768_i32 : i32 to vector<1x1024xi32>
      %49 = arith.cmpi eq, %13, %48 : vector<1x1024xi32>
      %50 = arith.ori %41, %49 : vector<1x1024xi1>
      %c768_i32_24 = arith.constant 768 : i32
      %51 = vector.broadcast %c768_i32_24 : i32 to vector<1x1024xi32>
      %52 = arith.cmpi eq, %13, %51 : vector<1x1024xi32>
      %cst_25 = arith.constant 1.000000e+00 : f32
      %cst_26 = arith.constant 0.000000e+00 : f32
      %53 = vector.broadcast %cst_25 : f32 to vector<1x1024xf32>
      %54 = vector.broadcast %cst_26 : f32 to vector<1x1024xf32>
      %55 = arith.select %52, %53, %54 : vector<1x1024xi1>, vector<1x1024xf32>
      %56 = arith.addf %47, %55 : vector<1x1024xf32>
      %cst_27 = arith.constant -1.000000e+30 : f32
      %57 = vector.shape_cast %50 : vector<1x1024xi1> to vector<1x1024xi1>
      %58 = vector.broadcast %57 : vector<1x1024xi1> to vector<8x1024xi1>
      %59 = vector.broadcast %cst_27 : f32 to vector<8x1024xf32>
      %60 = arith.select %58, %12, %59 : vector<8x1024xi1>, vector<8x1024xf32>
      %cst_28 = arith.constant dense<0xFF800000> : vector<8xf32>
      %61 = vector.multi_reduction <maximumf>, %60, %cst_28 [1] : vector<8x1024xf32> to vector<8xf32>
      %62 = vector.shape_cast %61 : vector<8xf32> to vector<8x1xf32>
      %63 = vector.broadcast %62 : vector<8x1xf32> to vector<8x1024xf32>
      %64 = arith.subf %60, %63 : vector<8x1024xf32>
      %65 = math.exp %64 : vector<8x1024xf32>
      %cst_29 = arith.constant dense<0.000000e+00> : vector<8xf32>
      %66 = vector.multi_reduction <add>, %65, %cst_29 [1] : vector<8x1024xf32> to vector<8xf32>
      %67 = vector.shape_cast %66 : vector<8xf32> to vector<8x1xf32>
      %68 = vector.broadcast %56 : vector<1x1024xf32> to vector<8x1024xf32>
      %69 = arith.mulf %65, %68 : vector<8x1024xf32>
      %cst_30 = arith.constant dense<0.000000e+00> : vector<8xf32>
      %70 = vector.multi_reduction <add>, %69, %cst_30 [1] : vector<8x1024xf32> to vector<8xf32>
      %71 = vector.shape_cast %70 : vector<8xf32> to vector<8x1xf32>
      %72 = tpu.reciprocal %67 {approx = true} : vector<8x1xf32> -> vector<8x1xf32>
      %73 = arith.mulf %71, %72 : vector<8x1xf32>
      %74 = vector.shape_cast %73 : vector<8x1xf32> to vector<8x1xf32>
      %75 = vector.broadcast %74 : vector<8x1xf32> to vector<8x128xf32>
      %c0_31 = arith.constant 0 : index
      %c0_32 = arith.constant 0 : index
      %76 = vector.load %arg5[%c0_31, %c0_32] : memref<8x128xf32, #tpu.memory_space<vmem>>, vector<8x128xf32>
      tpu.vector_store %arg5[%c0_31, %c0_32], %75 {strides = array<i32>} : memref<8x128xf32, #tpu.memory_space<vmem>>, vector<8x128xf32>,
    } else {
    }
    return
  }
  func.func @transform_0(%arg0: i32, %arg1: i32) -> (i32, i32) {
    %c0_i32 = arith.constant 0 : i32
    return %arg0, %arg1 : i32, i32
  }
  func.func @transform_1(%arg0: i32, %arg1: i32) -> (i32, i32) {
    %c0_i32 = arith.constant 0 : i32
    %c0_i32_0 = arith.constant 0 : i32
    return %arg1, %c0_i32 : i32, i32
  }
  func.func @transform_2(%arg0: i32, %arg1: i32) -> (i32, i32) {
    %c0_i32 = arith.constant 0 : i32
    %c0_i32_0 = arith.constant 0 : i32
    %c0_i32_1 = arith.constant 0 : i32
    return %c0_i32, %c0_i32_0 : i32, i32
  }
  func.func @transform_3(%arg0: i32, %arg1: i32) -> (i32, i32) {
    %c0_i32 = arith.constant 0 : i32
    %c0_i32_0 = arith.constant 0 : i32
    return %arg0, %c0_i32 : i32, i32
  }
}

</mosaic_0001>

<llo_original>
// kernel: tpu_custom_call.1
$region0: #{tpu_custom_call.1}
  #allocation0 [shape = 'u32[]', space=smem, size = 0x4, offset = 0x4, fixed_abs, tag = 'smem constant byte address 0x4 - core index']
  #allocation1 [shape = 'u32[144,128]{1,0:T(1,128)}', space=vmem, size = 0x12000, scoped, tag = 'internal scratch']
  #allocation2 [shape = 'f32[8,1024]{1,0:T(8,128)}', space=vmem, size = 0x8000, scoped, tag = 'scratch operand']
  %s0 = inlined_call_operand.hbm [shape: f32[16,32], index: 0, kind: input, shape index: {}]
  %s1 = inlined_call_operand.hbm [shape: f32[32,1024], index: 1, kind: input, shape index: {}]
  %s2 = inlined_call_operand.hbm [shape: f32[1,1024], index: 2, kind: input, shape index: {}]
  %s3 = inlined_call_operand.hbm [shape: f32[16,128], index: 3, kind: output, shape index: {}]
  %s4 = sld [smem:[#allocation0]]
  $region65: #{tpu_custom_call.1} parent=0
    _
  %s6 = ssub.s32 1, %s4
  %s7 = scalar_select 0, %s6, %s4
  $region1: #{tpu_custom_call.1} parent=0
    #allocation3 [shape = 'u8[8192]{0}', space=vmem, size = 0x2000, scoped, tag = 'input window, operand 0']
    #allocation4 [shape = 's32[2]{0}', space=sflag, size = 0x8, scoped, tag = 'scoped memory for tpu_custom_call.1']
    #allocation5 [shape = 's32[2]{0}', space=sflag, size = 0x8, scoped, tag = 'scoped memory for tpu_custom_call.1']
    #allocation6 [shape = 'u8[131072]{0}', space=vmem, size = 0x20000, scoped, tag = 'input window, operand 1, single buffered']
    #allocation7 [shape = 's32[1]{0}', space=sflag, size = 0x4, scoped, tag = 'scoped memory for tpu_custom_call.1']
    #allocation8 [shape = 'u8[4096]{0}', space=vmem, size = 0x1000, scoped, tag = 'input window, operand 2, single buffered']
    #allocation9 [shape = 'u8[8192]{0}', space=vmem, size = 0x2000, scoped, tag = 'output window, operand 0']
    %8 = vsyncpa [#allocation4], 0
    %s9 = scalar_lea.sflag [#allocation4], 1
    %10 = vsyncpa %s9, 0
    %11 = vsyncpa [#allocation7], 0
    %12 = vsyncpa [#allocation5], 0
    %s13 = scalar_lea.sflag [#allocation5], 1
    %14 = vsyncpa %s13, 0
    loop: start=0, step=1, limit=4
    $region2: #{tpu_custom_call.1} parent=1 // loop_pre_header
      _
    $region3: #{tpu_custom_call.1} parent=1 // loop_header
      %s16 = sphi 0, %s20
      %p17 = scmp.ge.s32.totalorder %s16, 4
      %s23 = sphi 0, %s35
      %s24 = sphi 0, %s31
      %s25 = sphi 0, %s23
      %s26 = sphi 0, %s24
      %s27 = sphi 0, %s25
      %s28 = sphi 0, %s26
      %s40 = sphi 0, %s42
      %s43 = sphi 0, %s40
      %s44 = sphi 0, %s43
      %s60 = sphi 0, %s44
      %s66 = sphi 0, %s68
      %s69 = sphi 0, %s66
      %s70 = sphi 0, %s69
      %s86 = sphi 0, %s70
      %s90 = sphi 0, %s90
      %s92 = sphi 0, %s90
      %s93 = sphi 0, %s92
      %s107 = sphi 0, %s93
      %s113 = sphi 0, %s115
      %s116 = sphi 0, %s113
      %s117 = sphi 0, %s116
      %s133 = sphi 0, %s117
    $region4: #{tpu_custom_call.1} parent=1 // loop_header_branch
      %19 = sbr.rel (%p17) target = $region8
    $region5: #{tpu_custom_call.1} parent=1 // loop_body
      %s21 = ssub.s32 %s16, 1
      %s22 = ssub.s32 %s16, 2
      %s29 = sadd.s32 1, %s24
      %p30 = scmp.ge.s32.totalorder %s29, 1
      %s31 = scalar_select %p30, 0, %s29
      %s32 = sadd.s32 1, %s23
      %s33 = scalar_select %p30, %s32, %s23
      %p34 = scmp.ge.s32.totalorder %s33, 2
      %s35 = scalar_select %p34, 0, %s33
      %s36 = ssub.s32 %s23, %s35
      %s37 = ssub.s32 %s24, %s31
      %s38 = sor.u32 %s36, %s37
      %p39 = scmp.eq.s32.totalorder %s38, 0
      %s41 = sadd.s32 %s40, 1
      %s42 = scalar_select %p39, %s40, %s41
      %p45 = pneg %p39
      %p46 = scmp.eq.s32.totalorder %s16, 1
      %p47 = por %p45, %p46
      %p48 = scmp.ne.s32.totalorder %s40, %s43
      %p49 = scmp.eq.s32.totalorder %s16, 0
      %p50 = por %p48, %p49
      %p51 = scmp.ne.s32.totalorder %s40, %s43
      %p52 = scmp.eq.s32.totalorder %s21, 1
      %p53 = por %p51, %p52
      %p54 = scmp.ne.s32.totalorder %s43, %s44
      %p55 = scmp.eq.s32.totalorder %s21, 0
      %p56 = por %p54, %p55
      %p57 = scmp.ne.s32.totalorder %s43, %s44
      %p58 = scmp.eq.s32.totalorder %s22, 1
      %p59 = por %p57, %p58
      %p61 = scmp.ne.s32.totalorder %s44, %s60
      %p62 = scmp.eq.s32.totalorder %s22, 0
      %p63 = por %p61, %p62
      %s64 = ssub.s32 %s24, %s31
      %p65 = scmp.eq.s32.totalorder %s64, 0
      %s67 = sadd.s32 %s66, 1
      %s68 = scalar_select %p65, %s66, %s67
      %p71 = pneg %p65
      %p72 = scmp.eq.s32.totalorder %s16, 1
      %p73 = por %p71, %p72
      %p74 = scmp.ne.s32.totalorder %s66, %s69
      %p75 = scmp.eq.s32.totalorder %s16, 0
      %p76 = por %p74, %p75
      %p77 = scmp.ne.s32.totalorder %s66, %s69
      %p78 = scmp.eq.s32.totalorder %s21, 1
      %p79 = por %p77, %p78
      %p80 = scmp.ne.s32.totalorder %s69, %s70
      %p81 = scmp.eq.s32.totalorder %s21, 0
      %p82 = por %p80, %p81
      %p83 = scmp.ne.s32.totalorder %s69, %s70
      %p84 = scmp.eq.s32.totalorder %s22, 1
      %p85 = por %p83, %p84
      %p87 = scmp.ne.s32.totalorder %s70, %s86
      %p88 = scmp.eq.s32.totalorder %s22, 0
      %p89 = por %p87, %p88
      %s91 = sadd.s32 %s90, 1
      %p94 = scmp.eq.s32.totalorder %s16, 1
      %p95 = scmp.ne.s32.totalorder %s90, %s92
      %p96 = scmp.eq.s32.totalorder %s16, 0
      %p97 = por %p95, %p96
      %p98 = scmp.ne.s32.totalorder %s90, %s92
      %p99 = scmp.eq.s32.totalorder %s21, 1
      %p100 = por %p98, %p99
      %p101 = scmp.ne.s32.totalorder %s92, %s93
      %p102 = scmp.eq.s32.totalorder %s21, 0
      %p103 = por %p101, %p102
      %p104 = scmp.ne.s32.totalorder %s92, %s93
      %p105 = scmp.eq.s32.totalorder %s22, 1
      %p106 = por %p104, %p105
      %p108 = scmp.ne.s32.totalorder %s93, %s107
      %p109 = scmp.eq.s32.totalorder %s22, 0
      %p110 = por %p108, %p109
      %s111 = ssub.s32 %s23, %s35
      %p112 = scmp.eq.s32.totalorder %s111, 0
      %s114 = sadd.s32 %s113, 1
      %s115 = scalar_select %p112, %s113, %s114
      %p118 = pneg %p112
      %p119 = scmp.eq.s32.totalorder %s16, 1
      %p120 = por %p118, %p119
      %p121 = scmp.ne.s32.totalorder %s113, %s116
      %p122 = scmp.eq.s32.totalorder %s16, 0
      %p123 = por %p121, %p122
      %p124 = scmp.ne.s32.totalorder %s113, %s116
      %p125 = scmp.eq.s32.totalorder %s21, 1
      %p126 = por %p124, %p125
      %p127 = scmp.ne.s32.totalorder %s116, %s117
      %p128 = scmp.eq.s32.totalorder %s21, 0
      %p129 = por %p127, %p128
      %p130 = scmp.ne.s32.totalorder %s116, %s117
      %p131 = scmp.eq.s32.totalorder %s22, 1
      %p132 = por %p130, %p131
      %p134 = scmp.ne.s32.totalorder %s117, %s133
      %p135 = scmp.eq.s32.totalorder %s22, 0
      %p136 = por %p134, %p135
      %p137 = scmp.le.s32.totalorder 1, %s16
      %p138 = scmp.lt.s32.totalorder %s16, 3
      %p139 = pnand %p137, %p138
      %p140 = pneg %p139
      // Predicated region
      $region9: #{tpu_custom_call.1} parent=5 // pred_check
        _
      $region10: #{tpu_custom_call.1} parent=5 // pred_check_branch
        %142 = sbr.rel (%p139) target = $region12
      $region11: #{tpu_custom_call.1} parent=5 // pred_region
        %s143 = ssub.s32 %s16, 1
        // Predicated region
        $region13: #{tpu_custom_call.1} parent=11 // pred_check
          %p144 = pneg %p82
        $region14: #{tpu_custom_call.1} parent=11 // pred_check_branch
          %146 = sbr.rel (%p144) target = $region16
        $region15: #{tpu_custom_call.1} parent=11 // pred_region
          %s147 = smul.u32 4, %s26
          %s149 = ssub.s32 4096, 4096
          %150 = vsyncadd [#allocation7], %s149
          %s151 = smul.addr %s147, 8
          %s152 = smul.addr %s151, 128
          %s153 = scalar_lea.hbm %s1, %s152
          %s154 = sshll.u32 [#allocation6], 4
          %s155 = int_to_ptr.vmem [resolvable:$true] %s154
          %160 = dma.hbm_to_vmem [thread:$0]  %s153, 4096, %s155, [#allocation7], 1024, 1024, 64
        $region16: #{tpu_custom_call.1} parent=11 // pred_fallthru
          _
        // Predicated region
        $region17: #{tpu_custom_call.1} parent=11 // pred_check
          %p161 = pneg %p103
        $region18: #{tpu_custom_call.1} parent=11 // pred_check_branch
          %163 = sbr.rel (%p161) target = $region20
        $region19: #{tpu_custom_call.1} parent=11 // pred_region
          %s165 = ssub.s32 128, 128
          %166 = vsyncadd [#allocation7], %s165
          %s168 = sshll.u32 [#allocation8], 4
          %s169 = int_to_ptr.vmem [resolvable:$true] %s168
          %171 = dma.hbm_to_vmem [thread:$0]  %s2, 128, %s169, [#allocation7]
        $region20: #{tpu_custom_call.1} parent=11 // pred_fallthru
          _
      $region12: #{tpu_custom_call.1} parent=5 // pred_fallthru
        _
      %p172 = scmp.lt.s32.totalorder %s16, 2
      // Predicated region
      $region21: #{tpu_custom_call.1} parent=5 // pred_check
        %p173 = pneg %p172
      $region22: #{tpu_custom_call.1} parent=5 // pred_check_branch
        %175 = sbr.rel (%p173) target = $region24
      $region23: #{tpu_custom_call.1} parent=5 // pred_region
        // Predicated region
        $region25: #{tpu_custom_call.1} parent=23 // pred_check
          %p176 = pneg %p50
        $region26: #{tpu_custom_call.1} parent=23 // pred_check_branch
          %178 = sbr.rel (%p176) target = $region28
        $region27: #{tpu_custom_call.1} parent=23 // pred_region
          %s179 = sand.u32 %s40, 1
          %s180 = scalar_lea.sflag [#allocation4], %s179
          %s181 = sand.u32 %s40, 1
          %s182 = smul.addr %s181, 8
          %s183 = scalar_lea.vmem [#allocation3], %s182
          %s185 = ssub.s32 128, 128
          %186 = vsyncadd %s180, %s185
          %s187 = sadd.s32 %s24, %s23
          %s188 = smul.addr %s187, 128
          %s189 = scalar_lea.hbm %s0, %s188
          %s191 = sshll.u32 %s183, 4
          %s192 = int_to_ptr.vmem [resolvable:$true] %s191
          %194 = dma.hbm_to_vmem [thread:$0]  %s189, 128, %s192, %s180
        $region28: #{tpu_custom_call.1} parent=23 // pred_fallthru
          _
      $region24: #{tpu_custom_call.1} parent=5 // pred_fallthru
        _
      %p195 = scmp.le.s32.totalorder 1, %s16
      %p196 = scmp.lt.s32.totalorder %s16, 3
      %p197 = pnand %p195, %p196
      %p198 = pneg %p197
      // Predicated region
      $region29: #{tpu_custom_call.1} parent=5 // pred_check
        _
      $region30: #{tpu_custom_call.1} parent=5 // pred_check_branch
        %200 = sbr.rel (%p197) target = $region32
      $region31: #{tpu_custom_call.1} parent=5 // pred_region
        %s201 = ssub.s32 %s16, 1
        %s202 = sand.u32 %s43, 1
        %s203 = scalar_lea.sflag [#allocation4], %s202
        %s204 = sand.u32 %s43, 1
        %s205 = smul.addr %s204, 8
        %s206 = scalar_lea.vmem [#allocation3], %s205
        // Predicated region
        $region33: #{tpu_custom_call.1} parent=31 // pred_check
          %p207 = pneg %p56
        $region34: #{tpu_custom_call.1} parent=31 // pred_check_branch
          %209 = sbr.rel (%p207) target = $region36
        $region35: #{tpu_custom_call.1} parent=31 // pred_region
          %210 = dma.done %s203, 128
        $region36: #{tpu_custom_call.1} parent=31 // pred_fallthru
          _
        // Predicated region
        $region37: #{tpu_custom_call.1} parent=31 // pred_check
          %p211 = pneg %p82
        $region38: #{tpu_custom_call.1} parent=31 // pred_check_branch
          %213 = sbr.rel (%p211) target = $region40
        $region39: #{tpu_custom_call.1} parent=31 // pred_region
          %214 = dma.done [#allocation7], 4096
        $region40: #{tpu_custom_call.1} parent=31 // pred_fallthru
          _
        // Predicated region
        $region41: #{tpu_custom_call.1} parent=31 // pred_check
          %p215 = pneg %p103
        $region42: #{tpu_custom_call.1} parent=31 // pred_check_branch
          %217 = sbr.rel (%p215) target = $region44
        $region43: #{tpu_custom_call.1} parent=31 // pred_region
          %218 = dma.done [#allocation7], 128
        $region44: #{tpu_custom_call.1} parent=31 // pred_fallthru
          _
        %s219 = sand.u32 %s43, 1
        %s220 = scalar_lea.sflag [#allocation4], %s219
        %s221 = sand.u32 %s43, 1
        %s222 = smul.addr %s221, 8
        %s223 = scalar_lea.vmem [#allocation3], %s222
        %p224 = pneg %p56
        %p225 = pneg %p53
        %p226 = pneg %p82
        %p227 = pneg %p79
        %p228 = pneg %p103
        %p229 = pneg %p100
        %p230 = pneg %p129
        %p231 = pneg %p126
        %s232 = sand.u32 %s116, 1
        %s233 = scalar_lea.sflag [#allocation5], %s232
        %s234 = sand.u32 %s116, 1
        %s235 = smul.addr %s234, 8
        %s236 = scalar_lea.vmem [#allocation9], %s235
        %s237 = smul.u32 4, %s26
        %p238 = scmp.eq.s32.totalorder %s26, 0
        // Predicated region
        $region45: #{tpu_custom_call.1} parent=31 // pred_check
          %p239 = pneg %p238
        $region46: #{tpu_custom_call.1} parent=31 // pred_check_branch
          %241 = sbr.rel (%p239) target = $region48
        $region47: #{tpu_custom_call.1} parent=31 // pred_region
          %v242 = vld [vmem:[#allocation8] sm:$0xff]
          %v244 = vlaneseq
          %v245 = vshrl.u32 %v244, 7
          %v246 = vsub.s32 0, %v245
          %v247 = vrot.slane %v242, %v246
          %v248 = vlaneseq
          %v249 = vshrl.u32 %v248, 7
          %v250 = vsub.s32 1, %v249
          %v251 = vrot.slane %v242, %v250
          %v252 = vlaneseq
          %v253 = vshrl.u32 %v252, 7
          %v254 = vsub.s32 2, %v253
          %v255 = vrot.slane %v242, %v254
          %v256 = vlaneseq
          %v257 = vshrl.u32 %v256, 7
          %v258 = vsub.s32 3, %v257
          %v259 = vrot.slane %v242, %v258
          %v260 = vlaneseq
          %v261 = vshrl.u32 %v260, 7
          %v262 = vsub.s32 4, %v261
          %v263 = vrot.slane %v242, %v262
          %v264 = vlaneseq
          %v265 = vshrl.u32 %v264, 7
          %v266 = vsub.s32 5, %v265
          %v267 = vrot.slane %v242, %v266
          %v268 = vlaneseq
          %v269 = vshrl.u32 %v268, 7
          %v270 = vsub.s32 6, %v269
          %v271 = vrot.slane %v242, %v270
          %v272 = vlaneseq
          %v273 = vshrl.u32 %v272, 7
          %v274 = vsub.s32 7, %v273
          %v275 = vrot.slane %v242, %v274
          %284 = vst [vmem:[#allocation2] sm:$0xff] %v247
          %285 = vst [vmem:[#allocation2 + $0x8] sm:$0xff] %v251
          %286 = vst [vmem:[#allocation2 + $0x10] sm:$0xff] %v255
          %287 = vst [vmem:[#allocation2 + $0x18] sm:$0xff] %v259
          %288 = vst [vmem:[#allocation2 + $0x20] sm:$0xff] %v263
          %289 = vst [vmem:[#allocation2 + $0x28] sm:$0xff] %v267
          %290 = vst [vmem:[#allocation2 + $0x30] sm:$0xff] %v271
          %291 = vst [vmem:[#allocation2 + $0x38] sm:$0xff] %v275
        $region48: #{tpu_custom_call.1} parent=31 // pred_fallthru
          _
        %v292 = vld [vmem:[#allocation2] sm:$0xff]
        %v293 = vld [vmem:[#allocation2 + $0x8] sm:$0xff]
        %v294 = vld [vmem:[#allocation2 + $0x10] sm:$0xff]
        %v295 = vld [vmem:[#allocation2 + $0x18] sm:$0xff]
        %v296 = vld [vmem:[#allocation2 + $0x20] sm:$0xff]
        %v297 = vld [vmem:[#allocation2 + $0x28] sm:$0xff]
        %v298 = vld [vmem:[#allocation2 + $0x30] sm:$0xff]
        %v299 = vld [vmem:[#allocation2 + $0x38] sm:$0xff]
        %v300 = vld [vmem:[%s206] sm:$0xff]
        %v301 = vld [vmem:[#allocation6] sm:$0xff]
        %v302 = vld [vmem:[#allocation6 + $0x8] sm:$0xff]
        %v303 = vld [vmem:[#allocation6 + $0x10] sm:$0xff]
        %v304 = vld [vmem:[#allocation6 + $0x18] sm:$0xff]
        %v305 = vld [vmem:[#allocation6 + $0x20] sm:$0xff]
        %v306 = vld [vmem:[#allocation6 + $0x28] sm:$0xff]
        %v307 = vld [vmem:[#allocation6 + $0x30] sm:$0xff]
        %v308 = vld [vmem:[#allocation6 + $0x38] sm:$0xff]
        %v309 = vld [vmem:[#allocation6 + $0x40] sm:$0xff]
        %v310 = vld [vmem:[#allocation6 + $0x48] sm:$0xff]
        %v311 = vld [vmem:[#allocation6 + $0x50] sm:$0xff]
        %v312 = vld [vmem:[#allocation6 + $0x58] sm:$0xff]
        %v313 = vld [vmem:[#allocation6 + $0x60] sm:$0xff]
        %v314 = vld [vmem:[#allocation6 + $0x68] sm:$0xff]
        %v315 = vld [vmem:[#allocation6 + $0x70] sm:$0xff]
        %v316 = vld [vmem:[#allocation6 + $0x78] sm:$0xff]
        %v317 = vld [vmem:[#allocation6 + $0x80] sm:$0xff]
        %v318 = vld [vmem:[#allocation6 + $0x88] sm:$0xff]
        %v319 = vld [vmem:[#allocation6 + $0x90] sm:$0xff]
        %v320 = vld [vmem:[#allocation6 + $0x98] sm:$0xff]
        %v321 = vld [vmem:[#allocation6 + $0xa0] sm:$0xff]
        %v322 = vld [vmem:[#allocation6 + $0xa8] sm:$0xff]
        %v323 = vld [vmem:[#allocation6 + $0xb0] sm:$0xff]
        %v324 = vld [vmem:[#allocation6 + $0xb8] sm:$0xff]
        %v325 = vld [vmem:[#allocation6 + $0xc0] sm:$0xff]
        %v326 = vld [vmem:[#allocation6 + $0xc8] sm:$0xff]
        %v327 = vld [vmem:[#allocation6 + $0xd0] sm:$0xff]
        %v328 = vld [vmem:[#allocation6 + $0xd8] sm:$0xff]
        %v329 = vld [vmem:[#allocation6 + $0xe0] sm:$0xff]
        %v330 = vld [vmem:[#allocation6 + $0xe8] sm:$0xff]
        %v331 = vld [vmem:[#allocation6 + $0xf0] sm:$0xff]
        %v332 = vld [vmem:[#allocation6 + $0xf8] sm:$0xff]
        %vm333 = vcmask 261120
        %v335 = vsel %vm333, %v300, 0
        %337 = vmatprep.subr.mxu0 %v302
        %338 = vmatpush1.msra.mxu0 %v301
        %339 = vmatprep.subr.mxu0 %v310
        %340 = vmatpush1.msra.mxu0 %v309
        %341 = vmatprep.subr.mxu0 %v318
        %342 = vmatpush1.msra.mxu0 %v317
        %343 = vmatprep.subr.mxu0 %v326
        %344 = vmatpush1.msra.mxu0 %v325
        %345 = vmatprep.subr.mxu0 0.0
        %346 = vmatpush1.msra.mxu0 0.0
        %347 = vmatprep.subr.mxu0 0.0
        %348 = vmatpush1.msra.mxu0 0.0
        %349 = vmatprep.subr.mxu0 0.0
        %350 = vmatpush1.msra.mxu0 0.0
        %351 = vmatprep.subr.mxu0 0.0
        %352 = vmatpush1.msra.mxu0 0.0
        %353 = vmatprep.subr.mxu0 0.0
        %354 = vmatpush1.msra.mxu0 0.0
        %355 = vmatprep.subr.mxu0 0.0
        %356 = vmatpush1.msra.mxu0 0.0
        %357 = vmatprep.subr.mxu0 0.0
        %358 = vmatpush1.msra.mxu0 0.0
        %359 = vmatprep.subr.mxu0 0.0
        %360 = vmatpush1.msra.mxu0 0.0
        %361 = vmatprep.subr.mxu0 0.0
        %362 = vmatpush1.msra.mxu0 0.0
        %363 = vmatprep.subr.mxu0 0.0
        %364 = vmatpush1.msra.mxu0 0.0
        %365 = vmatprep.subr.mxu0 0.0
        %366 = vmatpush1.msra.mxu0 0.0
        %367 = vmatprep.subr.mxu0 0.0
        %368 = vmatpush1.msra.mxu0 0.0
        %369 = vmatprep.subr.mxu0 0.0
        %370 = vmatpush1.msra.mxu0 0.0
        %371 = vmatprep.subr.mxu0 0.0
        %372 = vmatpush1.msra.mxu0 0.0
        %373 = vmatprep.subr.mxu0 0.0
        %374 = vmatpush1.msra.mxu0 0.0
        %375 = vmatprep.subr.mxu0 0.0
        %376 = vmatpush1.msra.mxu0 0.0
        %377 = vmatprep.subr.mxu0 0.0
        %378 = vmatpush1.msra.mxu0 0.0
        %379 = vmatprep.subr.mxu0 0.0
        %380 = vmatpush1.msra.mxu0 0.0
        %381 = vmatprep.subr.mxu0 0.0
        %382 = vmatpush1.msra.mxu0 0.0
        %383 = vmatprep.subr.mxu0 0.0
        %384 = vmatpush1.msra.mxu0 0.0
        %385 = vmatprep.subr.mxu0 0.0
        %386 = vmatpush1.msra.mxu0 0.0
        %387 = vmatprep.subr.mxu0 0.0
        %388 = vmatpush1.msra.mxu0 0.0
        %389 = vmatprep.subr.mxu0 0.0
        %390 = vmatpush1.msra.mxu0 0.0
        %391 = vmatprep.subr.mxu0 0.0
        %392 = vmatpush1.msra.mxu0 0.0
        %393 = vmatprep.subr.mxu0 0.0
        %394 = vmatpush1.msra.mxu0 0.0
        %395 = vmatprep.subr.mxu0 0.0
        %396 = vmatpush1.msra.mxu0 0.0
        %397 = vmatprep.subr.mxu0 0.0
        %398 = vmatpush1.msra.mxu0 0.0
        %399 = vmatprep.subr.mxu0 0.0
        %400 = vmatpush1.msra.mxu0 0.0
        %401 = vmatprep.mubr.f32.mxu0 0.0
        %402 = vmatmul.mubr.f32.gmra.mrb[0].mxu0 %v335
        %v403 = vpop.f32.mrb[0].mxu0
        %v404 = vadd.f32 0.0, %v403
        %v405 = vpop.f32.mrb[0].mxu0
        %v406 = vadd.f32 0.0, %v405
        %407 = vdwg.mxu0
        %408 = vmatprep.subr.mxu0 %v304
        %409 = vmatpush1.msra.mxu0 %v303
        %410 = vmatprep.subr.mxu0 %v312
        %411 = vmatpush1.msra.mxu0 %v311
        %412 = vmatprep.subr.mxu0 %v320
        %413 = vmatpush1.msra.mxu0 %v319
        %414 = vmatprep.subr.mxu0 %v328
        %415 = vmatpush1.msra.mxu0 %v327
        %416 = vmatprep.subr.mxu0 0.0
        %417 = vmatpush1.msra.mxu0 0.0
        %418 = vmatprep.subr.mxu0 0.0
        %419 = vmatpush1.msra.mxu0 0.0
        %420 = vmatprep.subr.mxu0 0.0
        %421 = vmatpush1.msra.mxu0 0.0
        %422 = vmatprep.subr.mxu0 0.0
        %423 = vmatpush1.msra.mxu0 0.0
        %424 = vmatprep.subr.mxu0 0.0
        %425 = vmatpush1.msra.mxu0 0.0
        %426 = vmatprep.subr.mxu0 0.0
        %427 = vmatpush1.msra.mxu0 0.0
        %428 = vmatprep.subr.mxu0 0.0
        %429 = vmatpush1.msra.mxu0 0.0
        %430 = vmatprep.subr.mxu0 0.0
        %431 = vmatpush1.msra.mxu0 0.0
        %432 = vmatprep.subr.mxu0 0.0
        %433 = vmatpush1.msra.mxu0 0.0
        %434 = vmatprep.subr.mxu0 0.0
        %435 = vmatpush1.msra.mxu0 0.0
        %436 = vmatprep.subr.mxu0 0.0
        %437 = vmatpush1.msra.mxu0 0.0
        %438 = vmatprep.subr.mxu0 0.0
        %439 = vmatpush1.msra.mxu0 0.0
        %440 = vmatprep.subr.mxu0 0.0
        %441 = vmatpush1.msra.mxu0 0.0
        %442 = vmatprep.subr.mxu0 0.0
        %443 = vmatpush1.msra.mxu0 0.0
        %444 = vmatprep.subr.mxu0 0.0
        %445 = vmatpush1.msra.mxu0 0.0
        %446 = vmatprep.subr.mxu0 0.0
        %447 = vmatpush1.msra.mxu0 0.0
        %448 = vmatprep.subr.mxu0 0.0
        %449 = vmatpush1.msra.mxu0 0.0
        %450 = vmatprep.subr.mxu0 0.0
        %451 = vmatpush1.msra.mxu0 0.0
        %452 = vmatprep.subr.mxu0 0.0
        %453 = vmatpush1.msra.mxu0 0.0
        %454 = vmatprep.subr.mxu0 0.0
        %455 = vmatpush1.msra.mxu0 0.0
        %456 = vmatprep.subr.mxu0 0.0
        %457 = vmatpush1.msra.mxu0 0.0
        %458 = vmatprep.subr.mxu0 0.0
        %459 = vmatpush1.msra.mxu0 0.0
        %460 = vmatprep.subr.mxu0 0.0
        %461 = vmatpush1.msra.mxu0 0.0
        %462 = vmatprep.subr.mxu0 0.0
        %463 = vmatpush1.msra.mxu0 0.0
        %464 = vmatprep.subr.mxu0 0.0
        %465 = vmatpush1.msra.mxu0 0.0
        %466 = vmatprep.subr.mxu0 0.0
        %467 = vmatpush1.msra.mxu0 0.0
        %468 = vmatprep.subr.mxu0 0.0
        %469 = vmatpush1.msra.mxu0 0.0
        %470 = vmatprep.subr.mxu0 0.0
        %471 = vmatpush1.msra.mxu0 0.0
        %472 = vmatprep.mubr.f32.mxu0 0.0
        %473 = vmatmul.mubr.f32.gmra.mrb[0].mxu0 %v335
        %v474 = vpop.f32.mrb[0].mxu0
        %v475 = vadd.f32 0.0, %v474
        %v476 = vpop.f32.mrb[0].mxu0
        %v477 = vadd.f32 0.0, %v476
        %478 = vdwg.mxu0
        %479 = vmatprep.subr.mxu0 %v306
        %480 = vmatpush1.msra.mxu0 %v305
        %481 = vmatprep.subr.mxu0 %v314
        %482 = vmatpush1.msra.mxu0 %v313
        %483 = vmatprep.subr.mxu0 %v322
        %484 = vmatpush1.msra.mxu0 %v321
        %485 = vmatprep.subr.mxu0 %v330
        %486 = vmatpush1.msra.mxu0 %v329
        %487 = vmatprep.subr.mxu0 0.0
        %488 = vmatpush1.msra.mxu0 0.0
        %489 = vmatprep.subr.mxu0 0.0
        %490 = vmatpush1.msra.mxu0 0.0
        %491 = vmatprep.subr.mxu0 0.0
        %492 = vmatpush1.msra.mxu0 0.0
        %493 = vmatprep.subr.mxu0 0.0
        %494 = vmatpush1.msra.mxu0 0.0
        %495 = vmatprep.subr.mxu0 0.0
        %496 = vmatpush1.msra.mxu0 0.0
        %497 = vmatprep.subr.mxu0 0.0
        %498 = vmatpush1.msra.mxu0 0.0
        %499 = vmatprep.subr.mxu0 0.0
        %500 = vmatpush1.msra.mxu0 0.0
        %501 = vmatprep.subr.mxu0 0.0
        %502 = vmatpush1.msra.mxu0 0.0
        %503 = vmatprep.subr.mxu0 0.0
        %504 = vmatpush1.msra.mxu0 0.0
        %505 = vmatprep.subr.mxu0 0.0
        %506 = vmatpush1.msra.mxu0 0.0
        %507 = vmatprep.subr.mxu0 0.0
        %508 = vmatpush1.msra.mxu0 0.0
        %509 = vmatprep.subr.mxu0 0.0
        %510 = vmatpush1.msra.mxu0 0.0
        %511 = vmatprep.subr.mxu0 0.0
        %512 = vmatpush1.msra.mxu0 0.0
        %513 = vmatprep.subr.mxu0 0.0
        %514 = vmatpush1.msra.mxu0 0.0
        %515 = vmatprep.subr.mxu0 0.0
        %516 = vmatpush1.msra.mxu0 0.0
        %517 = vmatprep.subr.mxu0 0.0
        %518 = vmatpush1.msra.mxu0 0.0
        %519 = vmatprep.subr.mxu0 0.0
        %520 = vmatpush1.msra.mxu0 0.0
        %521 = vmatprep.subr.mxu0 0.0
        %522 = vmatpush1.msra.mxu0 0.0
        %523 = vmatprep.subr.mxu0 0.0
        %524 = vmatpush1.msra.mxu0 0.0
        %525 = vmatprep.subr.mxu0 0.0
        %526 = vmatpush1.msra.mxu0 0.0
        %527 = vmatprep.subr.mxu0 0.0
        %528 = vmatpush1.msra.mxu0 0.0
        %529 = vmatprep.subr.mxu0 0.0
        %530 = vmatpush1.msra.mxu0 0.0
        %531 = vmatprep.subr.mxu0 0.0
        %532 = vmatpush1.msra.mxu0 0.0
        %533 = vmatprep.subr.mxu0 0.0
        %534 = vmatpush1.msra.mxu0 0.0
        %535 = vmatprep.subr.mxu0 0.0
        %536 = vmatpush1.msra.mxu0 0.0
        %537 = vmatprep.subr.mxu0 0.0
        %538 = vmatpush1.msra.mxu0 0.0
        %539 = vmatprep.subr.mxu0 0.0
        %540 = vmatpush1.msra.mxu0 0.0
        %541 = vmatprep.subr.mxu0 0.0
        %542 = vmatpush1.msra.mxu0 0.0
        %543 = vmatprep.mubr.f32.mxu0 0.0
        %544 = vmatmul.mubr.f32.gmra.mrb[0].mxu0 %v335
        %v545 = vpop.f32.mrb[0].mxu0
        %v546 = vadd.f32 0.0, %v545
        %v547 = vpop.f32.mrb[0].mxu0
        %v548 = vadd.f32 0.0, %v547
        %549 = vdwg.mxu0
        %550 = vmatprep.subr.mxu0 %v308
        %551 = vmatpush1.msra.mxu0 %v307
        %552 = vmatprep.subr.mxu0 %v316
        %553 = vmatpush1.msra.mxu0 %v315
        %554 = vmatprep.subr.mxu0 %v324
        %555 = vmatpush1.msra.mxu0 %v323
        %556 = vmatprep.subr.mxu0 %v332
        %557 = vmatpush1.msra.mxu0 %v331
        %558 = vmatprep.subr.mxu0 0.0
        %559 = vmatpush1.msra.mxu0 0.0
        %560 = vmatprep.subr.mxu0 0.0
        %561 = vmatpush1.msra.mxu0 0.0
        %562 = vmatprep.subr.mxu0 0.0
        %563 = vmatpush1.msra.mxu0 0.0
        %564 = vmatprep.subr.mxu0 0.0
        %565 = vmatpush1.msra.mxu0 0.0
        %566 = vmatprep.subr.mxu0 0.0
        %567 = vmatpush1.msra.mxu0 0.0
        %568 = vmatprep.subr.mxu0 0.0
        %569 = vmatpush1.msra.mxu0 0.0
        %570 = vmatprep.subr.mxu0 0.0
        %571 = vmatpush1.msra.mxu0 0.0
        %572 = vmatprep.subr.mxu0 0.0
        %573 = vmatpush1.msra.mxu0 0.0
        %574 = vmatprep.subr.mxu0 0.0
        %575 = vmatpush1.msra.mxu0 0.0
        %576 = vmatprep.subr.mxu0 0.0
        %577 = vmatpush1.msra.mxu0 0.0
        %578 = vmatprep.subr.mxu0 0.0
        %579 = vmatpush1.msra.mxu0 0.0
        %580 = vmatprep.subr.mxu0 0.0
        %581 = vmatpush1.msra.mxu0 0.0
        %582 = vmatprep.subr.mxu0 0.0
        %583 = vmatpush1.msra.mxu0 0.0
        %584 = vmatprep.subr.mxu0 0.0
        %585 = vmatpush1.msra.mxu0 0.0
        %586 = vmatprep.subr.mxu0 0.0
        %587 = vmatpush1.msra.mxu0 0.0
        %588 = vmatprep.subr.mxu0 0.0
        %589 = vmatpush1.msra.mxu0 0.0
        %590 = vmatprep.subr.mxu0 0.0
        %591 = vmatpush1.msra.mxu0 0.0
        %592 = vmatprep.subr.mxu0 0.0
        %593 = vmatpush1.msra.mxu0 0.0
        %594 = vmatprep.subr.mxu0 0.0
        %595 = vmatpush1.msra.mxu0 0.0
        %596 = vmatprep.subr.mxu0 0.0
        %597 = vmatpush1.msra.mxu0 0.0
        %598 = vmatprep.subr.mxu0 0.0
        %599 = vmatpush1.msra.mxu0 0.0
        %600 = vmatprep.subr.mxu0 0.0
        %601 = vmatpush1.msra.mxu0 0.0
        %602 = vmatprep.subr.mxu0 0.0
        %603 = vmatpush1.msra.mxu0 0.0
        %604 = vmatprep.subr.mxu0 0.0
        %605 = vmatpush1.msra.mxu0 0.0
        %606 = vmatprep.subr.mxu0 0.0
        %607 = vmatpush1.msra.mxu0 0.0
        %608 = vmatprep.subr.mxu0 0.0
        %609 = vmatpush1.msra.mxu0 0.0
        %610 = vmatprep.subr.mxu0 0.0
        %611 = vmatpush1.msra.mxu0 0.0
        %612 = vmatprep.subr.mxu0 0.0
        %613 = vmatpush1.msra.mxu0 0.0
        %614 = vmatprep.mubr.f32.mxu0 0.0
        %615 = vmatmul.mubr.f32.gmra.mrb[0].mxu0 %v335
        %v616 = vpop.f32.mrb[0].mxu0
        %v617 = vadd.f32 0.0, %v616
        %v618 = vpop.f32.mrb[0].mxu0
        %v619 = vadd.f32 0.0, %v618
        %620 = vdwg.mxu0
        %v621 = vadd.f32 %v292, %v404
        %v622 = vadd.f32 %v293, %v406
        %v623 = vadd.f32 %v294, %v475
        %v624 = vadd.f32 %v295, %v477
        %v625 = vadd.f32 %v296, %v546
        %v626 = vadd.f32 %v297, %v548
        %v627 = vadd.f32 %v298, %v617
        %v628 = vadd.f32 %v299, %v619
        %629 = vst [vmem:[#allocation2] sm:$0xff] %v621
        %630 = vst [vmem:[#allocation2 + $0x8] sm:$0xff] %v622
        %631 = vst [vmem:[#allocation2 + $0x10] sm:$0xff] %v623
        %632 = vst [vmem:[#allocation2 + $0x18] sm:$0xff] %v624
        %633 = vst [vmem:[#allocation2 + $0x20] sm:$0xff] %v625
        %634 = vst [vmem:[#allocation2 + $0x28] sm:$0xff] %v626
        %635 = vst [vmem:[#allocation2 + $0x30] sm:$0xff] %v627
        %636 = vst [vmem:[#allocation2 + $0x38] sm:$0xff] %v628
        // Predicated region
        $region49: #{tpu_custom_call.1} parent=31 // pred_check
          %p637 = pneg %p238
        $region50: #{tpu_custom_call.1} parent=31 // pred_check_branch
          %639 = sbr.rel (%p637) target = $region52
        $region51: #{tpu_custom_call.1} parent=31 // pred_region
          %v640 = vld [vmem:[#allocation2] sm:$0xff]
          %v641 = vld [vmem:[#allocation2 + $0x8] sm:$0xff]
          %v642 = vld [vmem:[#allocation2 + $0x10] sm:$0xff]
          %v643 = vld [vmem:[#allocation2 + $0x18] sm:$0xff]
          %v644 = vld [vmem:[#allocation2 + $0x20] sm:$0xff]
          %v645 = vld [vmem:[#allocation2 + $0x28] sm:$0xff]
          %v646 = vld [vmem:[#allocation2 + $0x30] sm:$0xff]
          %v647 = vld [vmem:[#allocation2 + $0x38] sm:$0xff]
          %v648 = vlaneseq
          %v649 = vand.u32 %v648, 127
          %v650 = vadd.s32 %v649, 128
          %v651 = vadd.s32 %v649, 256
          %v652 = vadd.s32 %v649, 384
          %v653 = vadd.s32 %v649, 512
          %v654 = vadd.s32 %v649, 640
          %v655 = vadd.s32 %v649, 768
          %v656 = vadd.s32 %v649, 896
          %vm657 = vcmp.eq.s32.totalorder %v649, 128
          %vm658 = vcmp.eq.s32.totalorder %v650, 128
          %vm659 = vcmp.eq.s32.totalorder %v651, 128
          %vm660 = vcmp.eq.s32.totalorder %v652, 128
          %vm661 = vcmp.eq.s32.totalorder %v653, 128
          %vm662 = vcmp.eq.s32.totalorder %v654, 128
          %vm663 = vcmp.eq.s32.totalorder %v655, 128
          %vm664 = vcmp.eq.s32.totalorder %v656, 128
          %v665 = vsel %vm657, 5.0, 0.0
          %v666 = vsel %vm658, 5.0, 0.0
          %v667 = vsel %vm659, 5.0, 0.0
          %v668 = vsel %vm660, 5.0, 0.0
          %v669 = vsel %vm661, 5.0, 0.0
          %v670 = vsel %vm662, 5.0, 0.0
          %v671 = vsel %vm663, 5.0, 0.0
          %v672 = vsel %vm664, 5.0, 0.0
          %vm673 = vcmp.eq.s32.totalorder %v649, 256
          %vm674 = vcmp.eq.s32.totalorder %v650, 256
          %vm675 = vcmp.eq.s32.totalorder %v651, 256
          %vm676 = vcmp.eq.s32.totalorder %v652, 256
          %vm677 = vcmp.eq.s32.totalorder %v653, 256
          %vm678 = vcmp.eq.s32.totalorder %v654, 256
          %vm679 = vcmp.eq.s32.totalorder %v655, 256
          %vm680 = vcmp.eq.s32.totalorder %v656, 256
          %vm681 = vmor %vm657, %vm673
          %vm682 = vmor %vm658, %vm674
          %vm683 = vmor %vm659, %vm675
          %vm684 = vmor %vm660, %vm676
          %vm685 = vmor %vm661, %vm677
          %vm686 = vmor %vm662, %vm678
          %vm687 = vmor %vm663, %vm679
          %vm688 = vmor %vm664, %vm680
          %v689 = vsel %vm673, 4.0, 0.0
          %v690 = vsel %vm674, 4.0, 0.0
          %v691 = vsel %vm675, 4.0, 0.0
          %v692 = vsel %vm676, 4.0, 0.0
          %v693 = vsel %vm677, 4.0, 0.0
          %v694 = vsel %vm678, 4.0, 0.0
          %v695 = vsel %vm679, 4.0, 0.0
          %v696 = vsel %vm680, 4.0, 0.0
          %v697 = vadd.f32 %v665, %v689
          %v698 = vadd.f32 %v666, %v690
          %v699 = vadd.f32 %v667, %v691
          %v700 = vadd.f32 %v668, %v692
          %v701 = vadd.f32 %v669, %v693
          %v702 = vadd.f32 %v670, %v694
          %v703 = vadd.f32 %v671, %v695
          %v704 = vadd.f32 %v672, %v696
          %vm705 = vcmp.eq.s32.totalorder %v649, 512
          %vm706 = vcmp.eq.s32.totalorder %v650, 512
          %vm707 = vcmp.eq.s32.totalorder %v651, 512
          %vm708 = vcmp.eq.s32.totalorder %v652, 512
          %vm709 = vcmp.eq.s32.totalorder %v653, 512
          %vm710 = vcmp.eq.s32.totalorder %v654, 512
          %vm711 = vcmp.eq.s32.totalorder %v655, 512
          %vm712 = vcmp.eq.s32.totalorder %v656, 512
          %vm713 = vmor %vm681, %vm705
          %vm714 = vmor %vm682, %vm706
          %vm715 = vmor %vm683, %vm707
          %vm716 = vmor %vm684, %vm708
          %vm717 = vmor %vm685, %vm709
          %vm718 = vmor %vm686, %vm710
          %vm719 = vmor %vm687, %vm711
          %vm720 = vmor %vm688, %vm712
          %v721 = vsel %vm705, 3.0, 0.0
          %v722 = vsel %vm706, 3.0, 0.0
          %v723 = vsel %vm707, 3.0, 0.0
          %v724 = vsel %vm708, 3.0, 0.0
          %v725 = vsel %vm709, 3.0, 0.0
          %v726 = vsel %vm710, 3.0, 0.0
          %v727 = vsel %vm711, 3.0, 0.0
          %v728 = vsel %vm712, 3.0, 0.0
          %v729 = vadd.f32 %v697, %v721
          %v730 = vadd.f32 %v698, %v722
          %v731 = vadd.f32 %v699, %v723
          %v732 = vadd.f32 %v700, %v724
          %v733 = vadd.f32 %v701, %v725
          %v734 = vadd.f32 %v702, %v726
          %v735 = vadd.f32 %v703, %v727
          %v736 = vadd.f32 %v704, %v728
          %vm737 = vcmp.eq.s32.totalorder %v649, 640
          %vm738 = vcmp.eq.s32.totalorder %v650, 640
          %vm739 = vcmp.eq.s32.totalorder %v651, 640
          %vm740 = vcmp.eq.s32.totalorder %v652, 640
          %vm741 = vcmp.eq.s32.totalorder %v653, 640
          %vm742 = vcmp.eq.s32.totalorder %v654, 640
          %vm743 = vcmp.eq.s32.totalorder %v655, 640
          %vm744 = vcmp.eq.s32.totalorder %v656, 640
          %vm745 = vmor %vm713, %vm737
          %vm746 = vmor %vm714, %vm738
          %vm747 = vmor %vm715, %vm739
          %vm748 = vmor %vm716, %vm740
          %vm749 = vmor %vm717, %vm741
          %vm750 = vmor %vm718, %vm742
          %vm751 = vmor %vm719, %vm743
          %vm752 = vmor %vm720, %vm744
          %v753 = vsel %vm737, 2.0, 0.0
          %v754 = vsel %vm738, 2.0, 0.0
          %v755 = vsel %vm739, 2.0, 0.0
          %v756 = vsel %vm740, 2.0, 0.0
          %v757 = vsel %vm741, 2.0, 0.0
          %v758 = vsel %vm742, 2.0, 0.0
          %v759 = vsel %vm743, 2.0, 0.0
          %v760 = vsel %vm744, 2.0, 0.0
          %v761 = vadd.f32 %v729, %v753
          %v762 = vadd.f32 %v730, %v754
          %v763 = vadd.f32 %v731, %v755
          %v764 = vadd.f32 %v732, %v756
          %v765 = vadd.f32 %v733, %v757
          %v766 = vadd.f32 %v734, %v758
          %v767 = vadd.f32 %v735, %v759
          %v768 = vadd.f32 %v736, %v760
          %vm769 = vcmp.eq.s32.totalorder %v649, 768
          %vm770 = vcmp.eq.s32.totalorder %v650, 768
          %vm771 = vcmp.eq.s32.totalorder %v651, 768
          %vm772 = vcmp.eq.s32.totalorder %v652, 768
          %vm773 = vcmp.eq.s32.totalorder %v653, 768
          %vm774 = vcmp.eq.s32.totalorder %v654, 768
          %vm775 = vcmp.eq.s32.totalorder %v655, 768
          %vm776 = vcmp.eq.s32.totalorder %v656, 768
          %vm777 = vmor %vm745, %vm769
          %vm778 = vmor %vm746, %vm770
          %vm779 = vmor %vm747, %vm771
          %vm780 = vmor %vm748, %vm772
          %vm781 = vmor %vm749, %vm773
          %vm782 = vmor %vm750, %vm774
          %vm783 = vmor %vm751, %vm775
          %vm784 = vmor %vm752, %vm776
          %v785 = vsel %vm769, 1.0, 0.0
          %v786 = vsel %vm770, 1.0, 0.0
          %v787 = vsel %vm771, 1.0, 0.0
          %v788 = vsel %vm772, 1.0, 0.0
          %v789 = vsel %vm773, 1.0, 0.0
          %v790 = vsel %vm774, 1.0, 0.0
          %v791 = vsel %vm775, 1.0, 0.0
          %v792 = vsel %vm776, 1.0, 0.0
          %v793 = vadd.f32 %v761, %v785
          %v794 = vadd.f32 %v762, %v786
          %v795 = vadd.f32 %v763, %v787
          %v796 = vadd.f32 %v764, %v788
          %v797 = vadd.f32 %v765, %v789
          %v798 = vadd.f32 %v766, %v790
          %v799 = vadd.f32 %v767, %v791
          %v800 = vadd.f32 %v768, %v792
          %v801 = vsel %vm777, 1, 0
          %v802 = vsel %vm778, 1, 0
          %v803 = vsel %vm779, 1, 0
          %v804 = vsel %vm780, 1, 0
          %v805 = vsel %vm781, 1, 0
          %v806 = vsel %vm782, 1, 0
          %v807 = vsel %vm783, 1, 0
          %v808 = vsel %vm784, 1, 0
          %vm809 = vcmp.eq.s32.totalorder %v801, 1
          %vm810 = vcmp.eq.s32.totalorder %v802, 1
          %vm811 = vcmp.eq.s32.totalorder %v803, 1
          %vm812 = vcmp.eq.s32.totalorder %v804, 1
          %vm813 = vcmp.eq.s32.totalorder %v805, 1
          %vm814 = vcmp.eq.s32.totalorder %v806, 1
          %vm815 = vcmp.eq.s32.totalorder %v807, 1
          %vm816 = vcmp.eq.s32.totalorder %v808, 1
          %v817 = vsel %vm809, %v640, -1e+30
          %v818 = vsel %vm810, %v641, -1e+30
          %v819 = vsel %vm811, %v642, -1e+30
          %v820 = vsel %vm812, %v643, -1e+30
          %v821 = vsel %vm813, %v644, -1e+30
          %v822 = vsel %vm814, %v645, -1e+30
          %v823 = vsel %vm815, %v646, -1e+30
          %v824 = vsel %vm816, %v647, -1e+30
          %v825 = vmax.f32 %v817, %v821
          %v826 = vmax.f32 %v818, %v822
          %v827 = vmax.f32 %v819, %v823
          %v828 = vmax.f32 %v820, %v824
          %v829 = vmax.f32 %v825, %v826
          %v830 = vmax.f32 %v827, %v828
          %v831 = vmax.f32 %v829, %v830
          %832 = vmax.xlane.f32.xlu0 %v831
          %v833 = vpop.xlane.xlu0 %832
          %v834 = vsub.f32 %v817, %v833
          %v835 = vsub.f32 %v818, %v833
          %v836 = vsub.f32 %v819, %v833
          %v837 = vsub.f32 %v820, %v833
          %v838 = vsub.f32 %v821, %v833
          %v839 = vsub.f32 %v822, %v833
          %v840 = vsub.f32 %v823, %v833
          %v841 = vsub.f32 %v824, %v833
          %v842 = vmul.f32 %v834, 1.442695
          %v843 = vpow.pop %v842
          %v844 = vmul.f32 %v835, 1.442695
          %v845 = vpow.pop %v844
          %v846 = vmul.f32 %v836, 1.442695
          %v847 = vpow.pop %v846
          %v848 = vmul.f32 %v837, 1.442695
          %v849 = vpow.pop %v848
          %v850 = vmul.f32 %v838, 1.442695
          %v851 = vpow.pop %v850
          %v852 = vmul.f32 %v839, 1.442695
          %v853 = vpow.pop %v852
          %v854 = vmul.f32 %v840, 1.442695
          %v855 = vpow.pop %v854
          %v856 = vmul.f32 %v841, 1.442695
          %v857 = vpow.pop %v856
          %v858 = vadd.f32 %v843, %v845
          %v859 = vadd.f32 %v858, %v847
          %v860 = vadd.f32 %v859, %v849
          %v861 = vadd.f32 %v860, %v851
          %v862 = vadd.f32 %v861, %v853
          %v863 = vadd.f32 %v862, %v855
          %v864 = vadd.f32 %v863, %v857
          %865 = vadd.xlane.f32.xlu0 %v864
          %v866 = vpop.xlane.xlu0 %865
          %v867 = vmul.f32 %v843, %v793
          %v868 = vmul.f32 %v845, %v794
          %v869 = vmul.f32 %v847, %v795
          %v870 = vmul.f32 %v849, %v796
          %v871 = vmul.f32 %v851, %v797
          %v872 = vmul.f32 %v853, %v798
          %v873 = vmul.f32 %v855, %v799
          %v874 = vmul.f32 %v857, %v800
          %v875 = vadd.f32 %v867, %v868
          %v876 = vadd.f32 %v875, %v869
          %v877 = vadd.f32 %v876, %v870
          %v878 = vadd.f32 %v877, %v871
          %v879 = vadd.f32 %v878, %v872
          %v880 = vadd.f32 %v879, %v873
          %v881 = vadd.f32 %v880, %v874
          %882 = vadd.xlane.f32.xlu0 %v881
          %v883 = vpop.xlane.xlu0 %882
          %v884 = vrcp.pop %v866
          %v885 = vmul.f32 %v883, %v884
          %886 = vst [vmem:[%s236] sm:$0xff] %v885
        $region52: #{tpu_custom_call.1} parent=31 // pred_fallthru
          _
        %s887 = sand.u32 %s116, 1
        %s888 = scalar_lea.sflag [#allocation5], %s887
        %s889 = sand.u32 %s116, 1
        %s890 = smul.addr %s889, 8
        %s891 = scalar_lea.vmem [#allocation9], %s890
        // Predicated region
        $region53: #{tpu_custom_call.1} parent=31 // pred_check
          %p892 = pneg %p126
        $region54: #{tpu_custom_call.1} parent=31 // pred_check_branch
          %894 = sbr.rel (%p892) target = $region56
        $region55: #{tpu_custom_call.1} parent=31 // pred_region
          %s896 = ssub.s32 128, 128
          %897 = vsyncadd %s888, %s896
          %s898 = smul.addr %s25, 128
          %s899 = scalar_lea.hbm %s3, %s898
          %s901 = sshll.u32 %s891, 4
          %s902 = int_to_ptr.vmem [resolvable:$true] %s901
          %904 = dma.vmem_to_hbm [thread:$0]  %s902, 128, %s899, %s888
        $region56: #{tpu_custom_call.1} parent=31 // pred_fallthru
          _
      $region32: #{tpu_custom_call.1} parent=5 // pred_fallthru
        _
      %p905 = scmp.le.s32.totalorder 2, %s16
      // Predicated region
      $region57: #{tpu_custom_call.1} parent=5 // pred_check
        %p906 = pneg %p905
      $region58: #{tpu_custom_call.1} parent=5 // pred_check_branch
        %908 = sbr.rel (%p906) target = $region60
      $region59: #{tpu_custom_call.1} parent=5 // pred_region
        %s909 = ssub.s32 %s16, 2
        // Predicated region
        $region61: #{tpu_custom_call.1} parent=59 // pred_check
          %p910 = pneg %p132
        $region62: #{tpu_custom_call.1} parent=59 // pred_check_branch
          %912 = sbr.rel (%p910) target = $region64
        $region63: #{tpu_custom_call.1} parent=59 // pred_region
          %s913 = sand.u32 %s117, 1
          %s914 = scalar_lea.sflag [#allocation5], %s913
          %s915 = sand.u32 %s117, 1
          %s916 = smul.addr %s915, 8
          %s917 = scalar_lea.vmem [#allocation9], %s916
          %918 = dma.done %s914, 128
        $region64: #{tpu_custom_call.1} parent=59 // pred_fallthru
          _
      $region60: #{tpu_custom_call.1} parent=5 // pred_fallthru
        _
    $region6: #{tpu_custom_call.1} parent=1 // loop_footer
      %s20 = sadd.s32 1, %s16
    $region7: #{tpu_custom_call.1} parent=1 // loop_footer_branch
      %15 = sbr.rel target = $region3
    $region8: #{tpu_custom_call.1} parent=1 // loop_exit
      _
    %919 = vsyncpa [#allocation4], 1
    %s920 = scalar_lea.sflag [#allocation4], 1
    %921 = vsyncpa %s920, 1
    %922 = vsyncpa [#allocation7], 1
    %923 = vsyncpa [#allocation5], 1
    %s924 = scalar_lea.sflag [#allocation5], 1
    %925 = vsyncpa %s924, 1

</llo_original>
